<compile_context>
chip_gen: v6e
topology: v6e:2x2x1
jax: 0.10.0
libtpu: 0.0.40
codegen_flags: <defaults>
</compile_context>

<pallas_src>
import functools

import jax
import jax.numpy as jnp
from jax.experimental import pallas as pl
from jax.experimental.pallas import tpu as pltpu

D_PAD = 128                       # latent_dim padded to one full lane width
H_PAD = 128                       # nhidden padded to one full lane width
B_ROWS = 16                       # bias tile rows (16 keeps bf16 sublane packing clean)
SLAB_ROWS = 3 * H_PAD + B_ROWS    # 400  (w1 | w2 | w3 | biases)
MAX_BLOCK_B = 1024                # cap per-block rows for very large batches


def _round_up(x, m):
    return ((x + m - 1) // m) * m


def _num_tensorcores():
    """2 blocks on v7x (2 TCs/chip); 1 everywhere else."""
    try:
        kind = jax.devices()[0].device_kind.lower()
        if "v7" in kind or "tpu7" in kind:
            return 2
    except Exception:
        pass
    return 1


_NUM_TC = _num_tensorcores()


def latent_ode_kernel(x_ref, p_ref, o_ref):
    # fc1 -> tanh -> fc2 -> tanh -> fc3 on one (block_b, 128) activation tile.
    w1 = p_ref[0 * H_PAD:1 * H_PAD, :]                              # (128, 128)
    w2 = p_ref[1 * H_PAD:2 * H_PAD, :]                              # (128, 128)
    w3 = p_ref[2 * H_PAD:3 * H_PAD, :]                              # (128, 128)
    b = p_ref[3 * H_PAD:3 * H_PAD + B_ROWS, :].astype(jnp.float32)  # (16, 128)
    b1, b2, b3 = b[0:1, :], b[1:2, :], b[2:3, :]

    x = x_ref[...]  # already in the slab dtype (bf16 by default)
    # MXU matmuls accumulate in f32; tanh / bias adds stay f32 (EUP/VPU path).
    h = jnp.tanh(jnp.dot(x, w1, preferred_element_type=jnp.float32) + b1)
    h = jnp.tanh(jnp.dot(h.astype(w2.dtype), w2,
                         preferred_element_type=jnp.float32) + b2)
    out = jnp.dot(h.astype(w3.dtype), w3, preferred_element_type=jnp.float32) + b3
    o_ref[...] = out.astype(o_ref.dtype)


def pack_params(params, dtype=jnp.bfloat16):
    """Pack torch-convention Linear params into one (400, 128) slab.

    params = (w1, b1, w2, b2, w3, b3) with w_i of shape (out_features, in_features)
    and b_i of shape (out_features,), exactly as nn.Linear stores them. Weights are
    transposed to (in, out) and zero-padded to 128x128. Default dtype bf16 runs the
    MXU natively and halves the weight DMA; pass jnp.float32 for exact-ish math.
    """
    w1, b1, w2, b2, w3, b3 = params
    nh, ld = w1.shape
    assert ld <= D_PAD and nh <= H_PAD and w3.shape == (ld, nh)

    def pad_t(w):  # (out, in) -> zero-padded (128, 128) holding w.T
        return jnp.zeros((H_PAD, H_PAD), dtype).at[:w.shape[1], :w.shape[0]].set(
            w.T.astype(dtype))

    bias = jnp.zeros((B_ROWS, H_PAD), dtype)
    bias = bias.at[0, :nh].set(b1.astype(dtype))
    bias = bias.at[1, :nh].set(b2.astype(dtype))
    bias = bias.at[2, :ld].set(b3.astype(dtype))
    return jnp.concatenate([pad_t(w1), pad_t(w2), pad_t(w3), bias], axis=0)


def _choose_blocking(n, num_splits):
    per_split = -(-n // num_splits)                       # cdiv
    block_b = min(_round_up(per_split, 16), MAX_BLOCK_B)  # multiple of 16 (bf16 safe)
    num_blocks = -(-n // block_b)
    return block_b, num_blocks, num_blocks * block_b


def _pallas_forward(x_pad, packed_params, block_b, num_blocks, out_dtype):
    n_pad = num_blocks * block_b
    itemsize_in = jnp.dtype(x_pad.dtype).itemsize
    itemsize_out = jnp.dtype(out_dtype).itemsize
    cost = pl.CostEstimate(
        flops=2 * 3 * n_pad * H_PAD * H_PAD,
        transcendentals=2 * n_pad * H_PAD,
        bytes_accessed=(n_pad * D_PAD * (itemsize_in + itemsize_out)
                        + SLAB_ROWS * H_PAD * jnp.dtype(packed_params.dtype).itemsize),
    )
    return pl.pallas_call(
        latent_ode_kernel,
        out_shape=jax.ShapeDtypeStruct((n_pad, D_PAD), out_dtype),
        grid=(num_blocks,),
        in_specs=[
            # activations: one (block_b, 128) lane-dense tile per grid step
            pl.BlockSpec((block_b, D_PAD), lambda i: (i, 0),
                         memory_space=pltpu.MemorySpace.VMEM),
            # parameter slab: constant block index -> DMA'd once, VMEM-resident
            pl.BlockSpec((SLAB_ROWS, H_PAD), lambda i: (0, 0),
                         memory_space=pltpu.MemorySpace.VMEM),
        ],
        out_specs=pl.BlockSpec((block_b, D_PAD), lambda i: (i, 0),
                               memory_space=pltpu.MemorySpace.VMEM),
        compiler_params=pltpu.CompilerParams(
            dimension_semantics=("parallel",)),  # v7x: batch blocks split across 2 TCs
        cost_estimate=cost,
    )(x_pad, packed_params)


def pad_latent_state(x, num_splits=None):
    """Pad (n, d) -> (n_pad, 128) in the slab dtype for the persistent-padded path."""
    num_splits = _NUM_TC if num_splits is None else num_splits
    n, d = x.shape
    block_b, num_blocks, n_pad = _choose_blocking(n, num_splits)
    x_pad = jnp.zeros((n_pad, D_PAD), x.dtype).at[:n, :d].set(x)
    return x_pad, block_b, num_blocks


def unpad_latent_state(x_pad, n, d):
    return x_pad[:n, :d]


@functools.partial(jax.jit, static_argnames=("block_b", "num_blocks"))
def latent_ode_func_padded(t, x_pad, packed_params, *, block_b, num_blocks):
    """ODE rhs on an already-padded (n_pad, 128) state; returns (n_pad, 128) f32.

    NOTE: padded batch rows are NOT zero in the result (they carry bias-derived
    values); mask them before any reduction over the batch axis.
    """
    del t  # unused by the forward pass (parity with PyTorch signature)
    x_pad = x_pad.astype(packed_params.dtype)
    return _pallas_forward(x_pad, packed_params, block_b, num_blocks, jnp.float32)


@jax.jit
def latent_ode_func(t, x, packed_params):
    """Pallas equivalent of LatentODEfunc.forward(t, x). `t` is unused (as in PyTorch).

    Jitted end-to-end so the pad / slice fuse with the kernel call. For use inside
    an ODE-solver loop, prefer latent_ode_func_padded + pad/unpad once outside the
    loop to avoid per-evaluation pad/slice traffic.
    """
    # TODO(synk): self.nfe (Python-side call counter) has no kernel equivalent; track it in the solver.
    del t
    n, d = x.shape
    block_b, num_blocks, n_pad = _choose_blocking(n, _NUM_TC)
    pdtype = packed_params.dtype
    x_pad = jnp.zeros((n_pad, D_PAD), pdtype).at[:n, :d].set(x.astype(pdtype))
    out_pad = _pallas_forward(x_pad, packed_params, block_b, num_blocks, x.dtype)
    return out_pad[:n, :d]


def init_params(key, latent_dim=8, nhidden=50, dtype=jnp.float32):
    """Deterministic synthetic params in PyTorch nn.Linear convention:
    weight (out_features, in_features), bias (out_features,)."""
    ks = jax.random.split(key, 6)
    scale = 0.1
    w1 = (scale * jax.random.normal(ks[0], (nhidden, latent_dim))).astype(dtype)
    b1 = (scale * jax.random.normal(ks[1], (nhidden,))).astype(dtype)
    w2 = (scale * jax.random.normal(ks[2], (nhidden, nhidden))).astype(dtype)
    b2 = (scale * jax.random.normal(ks[3], (nhidden,))).astype(dtype)
    w3 = (scale * jax.random.normal(ks[4], (latent_dim, nhidden))).astype(dtype)
    b3 = (scale * jax.random.normal(ks[5], (latent_dim,))).astype(dtype)
    return (w1, b1, w2, b2, w3, b3)


def reference(t, x, params):
    del t
    w1, b1, w2, b2, w3, b3 = params
    h = jnp.tanh(x @ w1.T + b1)
    h = jnp.tanh(h @ w2.T + b2)
    return h @ w3.T + b3


if __name__ == "__main__":
    # batch=300 exercises a non-multiple-of-block batch and (on v7x) 2 parallel blocks.
    latent_dim, nhidden, batch = 8, 50, 300
    key = jax.random.PRNGKey(0)
    kx, kp = jax.random.split(key)
    x = jax.random.normal(kx, (batch, latent_dim), dtype=jnp.float32)
    t = jnp.float32(0.0)  # unused by forward, kept for API parity

    params = init_params(kp, latent_dim, nhidden)
    packed = pack_params(params)          # bf16 slab by default: MXU-native, half the DMA

    ref = reference(t, x, params)

    # Convenience path: pad + kernel + slice fused under one jit.
    out = latent_ode_func(t, x, packed)
    out = jax.block_until_ready(out)
    assert out.shape == (batch, latent_dim)
    assert jnp.allclose(out, ref, atol=3e-2, rtol=3e-2), (
        f"max abs err {float(jnp.max(jnp.abs(out - ref)))}")

    # Persistent-padded path (what an ODE solver loop should use).
    x_pad, block_b, num_blocks = pad_latent_state(x)
    out_pad = latent_ode_func_padded(t, x_pad, packed,
                                     block_b=block_b, num_blocks=num_blocks)
    out_pad = jax.block_until_ready(out_pad)
    out2 = unpad_latent_state(out_pad, batch, latent_dim)
    assert jnp.allclose(out2, ref, atol=3e-2, rtol=3e-2), (
        f"max abs err {float(jnp.max(jnp.abs(out2 - ref)))}")

    print("KERNEL_OK")
</pallas_src>

<mosaic_0001>
module attributes {stable_mosaic.version = 11 : i64} {
  func.func @latent_ode_kernel(%arg0: i32, %arg1: memref<304x128xbf16, #tpu.memory_space<vmem>>, %arg2: memref<400x128xbf16, #tpu.memory_space<vmem>>, %arg3: memref<304x128xf32, #tpu.memory_space<vmem>>) attributes {dimension_semantics = [#tpu.dimension_semantics<parallel>], iteration_bounds = array<i64: 1>, scalar_prefetch = 0 : i64, scratch_operands = 0 : i64, tpu.core_type = #tpu.core_type<tc>, window_params = [{transform_indices = @transform_0, window_bounds = array<i64: 304, 128>}, {pipeline_mode = #tpu.pipeline_mode<synchronous>, transform_indices = @transform_1, window_bounds = array<i64: 400, 128>}, {transform_indices = @transform_2, window_bounds = array<i64: 304, 128>}]} {
    %c0 = arith.constant 0 : index
    %c0_0 = arith.constant 0 : index
    %0 = vector.load %arg2[%c0, %c0_0] : memref<400x128xbf16, #tpu.memory_space<vmem>>, vector<128x128xbf16>
    %c128 = arith.constant 128 : index
    %c0_1 = arith.constant 0 : index
    %1 = vector.load %arg2[%c128, %c0_1] : memref<400x128xbf16, #tpu.memory_space<vmem>>, vector<128x128xbf16>
    %c256 = arith.constant 256 : index
    %c0_2 = arith.constant 0 : index
    %2 = vector.load %arg2[%c256, %c0_2] : memref<400x128xbf16, #tpu.memory_space<vmem>>, vector<128x128xbf16>
    %c384 = arith.constant 384 : index
    %c0_3 = arith.constant 0 : index
    %3 = vector.load %arg2[%c384, %c0_3] : memref<400x128xbf16, #tpu.memory_space<vmem>>, vector<16x128xbf16>
    %4 = arith.extf %3 : vector<16x128xbf16> to vector<16x128xf32>
    %5 = vector.extract_strided_slice %4 {offsets = [0, 0], sizes = [1, 128], strides = [1, 1]} : vector<16x128xf32> to vector<1x128xf32>
    %6 = vector.extract_strided_slice %4 {offsets = [1, 0], sizes = [1, 128], strides = [1, 1]} : vector<16x128xf32> to vector<1x128xf32>
    %7 = vector.extract_strided_slice %4 {offsets = [2, 0], sizes = [1, 128], strides = [1, 1]} : vector<16x128xf32> to vector<1x128xf32>
    %c0_4 = arith.constant 0 : index
    %c0_5 = arith.constant 0 : index
    %8 = vector.load %arg1[%c0_4, %c0_5] : memref<304x128xbf16, #tpu.memory_space<vmem>>, vector<304x128xbf16>
    %cst = arith.constant dense<0.000000e+00> : vector<304x128xf32>
    %9 = tpu.matmul %8, %0, %cst {dimension_numbers = #tpu.dot_dimension_numbers<[1], [0], [0], [1], [0, 0, 1, 1], [], []>} : vector<304x128xbf16>, vector<128x128xbf16>, vector<304x128xf32> -> vector<304x128xf32>
    %10 = vector.broadcast %5 : vector<1x128xf32> to vector<304x128xf32>
    %11 = arith.addf %9, %10 : vector<304x128xf32>
    %12 = math.tanh %11 : vector<304x128xf32>
    %13 = arith.truncf %12 : vector<304x128xf32> to vector<304x128xbf16>
    %cst_6 = arith.constant dense<0.000000e+00> : vector<304x128xf32>
    %14 = tpu.matmul %13, %1, %cst_6 {dimension_numbers = #tpu.dot_dimension_numbers<[1], [0], [0], [1], [0, 0, 1, 1], [], []>} : vector<304x128xbf16>, vector<128x128xbf16>, vector<304x128xf32> -> vector<304x128xf32>
    %15 = vector.broadcast %6 : vector<1x128xf32> to vector<304x128xf32>
    %16 = arith.addf %14, %15 : vector<304x128xf32>
    %17 = math.tanh %16 : vector<304x128xf32>
    %18 = arith.truncf %17 : vector<304x128xf32> to vector<304x128xbf16>
    %cst_7 = arith.constant dense<0.000000e+00> : vector<304x128xf32>
    %19 = tpu.matmul %18, %2, %cst_7 {dimension_numbers = #tpu.dot_dimension_numbers<[1], [0], [0], [1], [0, 0, 1, 1], [], []>} : vector<304x128xbf16>, vector<128x128xbf16>, vector<304x128xf32> -> vector<304x128xf32>
    %20 = vector.broadcast %7 : vector<1x128xf32> to vector<304x128xf32>
    %21 = arith.addf %19, %20 : vector<304x128xf32>
    %c0_8 = arith.constant 0 : index
    %c0_9 = arith.constant 0 : index
    %22 = vector.load %arg3[%c0_8, %c0_9] : memref<304x128xf32, #tpu.memory_space<vmem>>, vector<304x128xf32>
    tpu.vector_store %arg3[%c0_8, %c0_9], %21 {strides = array<i32>} : memref<304x128xf32, #tpu.memory_space<vmem>>, vector<304x128xf32>,
    return
  }
  func.func @transform_0(%arg0: i32) -> (i32, i32) {
    %c0_i32 = arith.constant 0 : i32
    %c0_i32_0 = arith.constant 0 : i32
    return %arg0, %c0_i32 : i32, i32
  }
  func.func @transform_1(%arg0: i32) -> (i32, i32) {
    %c0_i32 = arith.constant 0 : i32
    %c0_i32_0 = arith.constant 0 : i32
    %c0_i32_1 = arith.constant 0 : i32
    return %c0_i32, %c0_i32_0 : i32, i32
  }
  func.func @transform_2(%arg0: i32) -> (i32, i32) {
    %c0_i32 = arith.constant 0 : i32
    %c0_i32_0 = arith.constant 0 : i32
    return %arg0, %c0_i32 : i32, i32
  }
}

</mosaic_0001>

<llo_original>
// kernel: latent_ode_func.1
$region0: #{latent_ode_func.1}
  #allocation0 [shape = 'u32[]', space=smem, size = 0x4, offset = 0x4, fixed_abs, tag = 'smem constant byte address 0x4 - core index']
  #allocation1 [shape = 'u32[144,128]{1,0:T(1,128)}', space=vmem, size = 0x12000, scoped, tag = 'internal scratch']
  %s0 = inlined_call_operand.vmem [shape: bf16[304,128], index: 0, kind: input, shape index: {}]
  %s1 = inlined_call_operand.vmem [shape: bf16[400,128], index: 1, kind: input, shape index: {}]
  %s2 = inlined_call_operand.vmem [shape: f32[304,128], index: 2, kind: output, shape index: {}]
  %s3 = sld [smem:[#allocation0]]
  $region18: #{latent_ode_func.1} parent=0
    _
  %s5 = ssub.s32 1, %s3
  %s6 = scalar_select 0, %s5, %s3
  // Predicated region
  $region2: #{latent_ode_func.1} parent=0 // pred_check
    _
  $region3: #{latent_ode_func.1} parent=0 // pred_check_branch
    %8 = sbr.rel (0) target = $region5
  $region4: #{latent_ode_func.1} parent=0 // pred_region
    _
  $region5: #{latent_ode_func.1} parent=0 // pred_fallthru
    _
  // Predicated region
  $region6: #{latent_ode_func.1} parent=0 // pred_check
    _
  $region7: #{latent_ode_func.1} parent=0 // pred_check_branch
    %10 = sbr.rel (0) target = $region9
  $region8: #{latent_ode_func.1} parent=0 // pred_region
    _
  $region9: #{latent_ode_func.1} parent=0 // pred_fallthru
    _
  %v12 = vld [vmem:[%s1] sm:$0xf]
  %v13 = vld [vmem:[%s1 + $0x4] sm:$0xf]
  %v14 = vld [vmem:[%s1 + $0x8] sm:$0xf]
  %v15 = vld [vmem:[%s1 + $0xc] sm:$0xf]
  %v16 = vld [vmem:[%s1 + $0x10] sm:$0xf]
  %v17 = vld [vmem:[%s1 + $0x14] sm:$0xf]
  %v18 = vld [vmem:[%s1 + $0x18] sm:$0xf]
  %v19 = vld [vmem:[%s1 + $0x1c] sm:$0xf]
  %v20 = vld [vmem:[%s1 + $0x20] sm:$0xf]
  %v21 = vld [vmem:[%s1 + $0x24] sm:$0xf]
  %v22 = vld [vmem:[%s1 + $0x28] sm:$0xf]
  %v23 = vld [vmem:[%s1 + $0x2c] sm:$0xf]
  %v24 = vld [vmem:[%s1 + $0x30] sm:$0xf]
  %v25 = vld [vmem:[%s1 + $0x34] sm:$0xf]
  %v26 = vld [vmem:[%s1 + $0x38] sm:$0xf]
  %v27 = vld [vmem:[%s1 + $0x3c] sm:$0xf]
  %v28 = vld [vmem:[%s1 + $0x40] sm:$0xf]
  %v29 = vld [vmem:[%s1 + $0x44] sm:$0xf]
  %v30 = vld [vmem:[%s1 + $0x48] sm:$0xf]
  %v31 = vld [vmem:[%s1 + $0x4c] sm:$0xf]
  %v32 = vld [vmem:[%s1 + $0x50] sm:$0xf]
  %v33 = vld [vmem:[%s1 + $0x54] sm:$0xf]
  %v34 = vld [vmem:[%s1 + $0x58] sm:$0xf]
  %v35 = vld [vmem:[%s1 + $0x5c] sm:$0xf]
  %v36 = vld [vmem:[%s1 + $0x60] sm:$0xf]
  %v37 = vld [vmem:[%s1 + $0x64] sm:$0xf]
  %v38 = vld [vmem:[%s1 + $0x68] sm:$0xf]
  %v39 = vld [vmem:[%s1 + $0x6c] sm:$0xf]
  %v40 = vld [vmem:[%s1 + $0x70] sm:$0xf]
  %v41 = vld [vmem:[%s1 + $0x74] sm:$0xf]
  %v42 = vld [vmem:[%s1 + $0x78] sm:$0xf]
  %v43 = vld [vmem:[%s1 + $0x7c] sm:$0xf]
  %v44 = vld [vmem:[%s1 + $0x80] sm:$0xf]
  %v45 = vld [vmem:[%s1 + $0x84] sm:$0xf]
  %v46 = vld [vmem:[%s1 + $0x88] sm:$0xf]
  %v47 = vld [vmem:[%s1 + $0x8c] sm:$0xf]
  %v48 = vld [vmem:[%s1 + $0x90] sm:$0xf]
  %v49 = vld [vmem:[%s1 + $0x94] sm:$0xf]
  %v50 = vld [vmem:[%s1 + $0x98] sm:$0xf]
  %v51 = vld [vmem:[%s1 + $0x9c] sm:$0xf]
  %v52 = vld [vmem:[%s1 + $0xa0] sm:$0xf]
  %v53 = vld [vmem:[%s1 + $0xa4] sm:$0xf]
  %v54 = vld [vmem:[%s1 + $0xa8] sm:$0xf]
  %v55 = vld [vmem:[%s1 + $0xac] sm:$0xf]
  %v56 = vld [vmem:[%s1 + $0xb0] sm:$0xf]
  %v57 = vld [vmem:[%s1 + $0xb4] sm:$0xf]
  %v58 = vld [vmem:[%s1 + $0xb8] sm:$0xf]
  %v59 = vld [vmem:[%s1 + $0xbc] sm:$0xf]
  %v60 = vld [vmem:[%s1 + $0xc0] sm:$0xf]
  %v61 = vunpack.c.l.bf16 %v60
  %v62 = vld [vmem:[%s0] sm:$0xf]
  %v63 = vld [vmem:[%s0 + $0x4] sm:$0xf]
  %v64 = vld [vmem:[%s0 + $0x8] sm:$0xf]
  %v65 = vld [vmem:[%s0 + $0xc] sm:$0xf]
  %v66 = vld [vmem:[%s0 + $0x10] sm:$0xf]
  %v67 = vld [vmem:[%s0 + $0x14] sm:$0xf]
  %v68 = vld [vmem:[%s0 + $0x18] sm:$0xf]
  %v69 = vld [vmem:[%s0 + $0x1c] sm:$0xf]
  %v70 = vld [vmem:[%s0 + $0x20] sm:$0xf]
  %v71 = vld [vmem:[%s0 + $0x24] sm:$0xf]
  %v72 = vld [vmem:[%s0 + $0x28] sm:$0xf]
  %v73 = vld [vmem:[%s0 + $0x2c] sm:$0xf]
  %v74 = vld [vmem:[%s0 + $0x30] sm:$0xf]
  %v75 = vld [vmem:[%s0 + $0x34] sm:$0xf]
  %v76 = vld [vmem:[%s0 + $0x38] sm:$0xf]
  %v77 = vld [vmem:[%s0 + $0x3c] sm:$0xf]
  %v78 = vld [vmem:[%s0 + $0x40] sm:$0xf]
  %v79 = vld [vmem:[%s0 + $0x44] sm:$0xf]
  %v80 = vld [vmem:[%s0 + $0x48] sm:$0xf]
  %v81 = vld [vmem:[%s0 + $0x4c] sm:$0xf]
  %v82 = vld [vmem:[%s0 + $0x50] sm:$0xf]
  %v83 = vld [vmem:[%s0 + $0x54] sm:$0xf]
  %v84 = vld [vmem:[%s0 + $0x58] sm:$0xf]
  %v85 = vld [vmem:[%s0 + $0x5c] sm:$0xf]
  %v86 = vld [vmem:[%s0 + $0x60] sm:$0xf]
  %v87 = vld [vmem:[%s0 + $0x64] sm:$0xf]
  %v88 = vld [vmem:[%s0 + $0x68] sm:$0xf]
  %v89 = vld [vmem:[%s0 + $0x6c] sm:$0xf]
  %v90 = vld [vmem:[%s0 + $0x70] sm:$0xf]
  %v91 = vld [vmem:[%s0 + $0x74] sm:$0xf]
  %v92 = vld [vmem:[%s0 + $0x78] sm:$0xf]
  %v93 = vld [vmem:[%s0 + $0x7c] sm:$0xf]
  %v94 = vld [vmem:[%s0 + $0x80] sm:$0xf]
  %v95 = vld [vmem:[%s0 + $0x84] sm:$0xf]
  %v96 = vld [vmem:[%s0 + $0x88] sm:$0xf]
  %v97 = vld [vmem:[%s0 + $0x8c] sm:$0xf]
  %v98 = vld [vmem:[%s0 + $0x90] sm:$0xf]
  %v99 = vld [vmem:[%s0 + $0x94] sm:$0xf]
  %v100 = vlaneseq
  %v101 = vshrl.u32 %v100, 7
  %v102 = vsub.s32 0, %v101
  %v103 = vrot.slane %v61, %v102
  %v142 = vunpack.c.l.b16 %v62
  %v143 = vunpack.c.l.b16 %v63
  %v144 = vunpack.c.l.b16 %v64
  %v145 = vunpack.c.l.b16 %v65
  %v146 = vunpack.c.l.b16 %v66
  %v147 = vunpack.c.l.b16 %v67
  %v148 = vunpack.c.l.b16 %v68
  %v149 = vunpack.c.l.b16 %v69
  %v150 = vunpack.c.l.b16 %v70
  %v151 = vunpack.c.l.b16 %v71
  %v152 = vunpack.c.l.b16 %v72
  %v153 = vunpack.c.l.b16 %v73
  %v154 = vunpack.c.l.b16 %v74
  %v155 = vunpack.c.l.b16 %v75
  %v156 = vunpack.c.l.b16 %v76
  %v157 = vunpack.c.l.b16 %v77
  %v158 = vunpack.c.l.b16 %v78
  %v159 = vunpack.c.l.b16 %v79
  %v160 = vunpack.c.l.b16 %v80
  %v161 = vunpack.c.l.b16 %v81
  %v162 = vunpack.c.l.b16 %v82
  %v163 = vunpack.c.l.b16 %v83
  %v164 = vunpack.c.l.b16 %v84
  %v165 = vunpack.c.l.b16 %v85
  %v166 = vunpack.c.l.b16 %v86
  %v167 = vunpack.c.l.b16 %v87
  %v168 = vunpack.c.l.b16 %v88
  %v169 = vunpack.c.l.b16 %v89
  %v170 = vunpack.c.l.b16 %v90
  %v171 = vunpack.c.l.b16 %v91
  %v172 = vunpack.c.l.b16 %v92
  %v173 = vunpack.c.l.b16 %v93
  %v174 = vunpack.c.l.b16 %v94
  %v175 = vunpack.c.l.b16 %v95
  %v176 = vunpack.c.l.b16 %v96
  %v177 = vunpack.c.l.b16 %v97
  %v178 = vunpack.c.l.b16 %v98
  %v179 = vunpack.c.l.b16 %v99
  %v180 = vpack.c.b16 %v143, %v142
  %v181 = vpack.c.b16 %v145, %v144
  %v182 = vpack.c.b16 %v147, %v146
  %v183 = vpack.c.b16 %v149, %v148
  %v184 = vpack.c.b16 %v151, %v150
  %v185 = vpack.c.b16 %v153, %v152
  %v186 = vpack.c.b16 %v155, %v154
  %v187 = vpack.c.b16 %v157, %v156
  %v188 = vpack.c.b16 %v159, %v158
  %v189 = vpack.c.b16 %v161, %v160
  %v190 = vpack.c.b16 %v163, %v162
  %v191 = vpack.c.b16 %v165, %v164
  %v192 = vpack.c.b16 %v167, %v166
  %v193 = vpack.c.b16 %v169, %v168
  %v194 = vpack.c.b16 %v171, %v170
  %v195 = vpack.c.b16 %v173, %v172
  %v196 = vpack.c.b16 %v175, %v174
  %v197 = vpack.c.b16 %v177, %v176
  %v198 = vpack.c.b16 %v179, %v178
  %v234 = vunpack.c.l.b16 %v12
  %v235 = vunpack.c.l.b16 %v13
  %v236 = vunpack.c.l.b16 %v14
  %v237 = vunpack.c.l.b16 %v15
  %v238 = vunpack.c.l.b16 %v16
  %v239 = vunpack.c.l.b16 %v17
  %v240 = vunpack.c.l.b16 %v18
  %v241 = vunpack.c.l.b16 %v19
  %v242 = vunpack.c.l.b16 %v20
  %v243 = vunpack.c.l.b16 %v21
  %v244 = vunpack.c.l.b16 %v22
  %v245 = vunpack.c.l.b16 %v23
  %v246 = vunpack.c.l.b16 %v24
  %v247 = vunpack.c.l.b16 %v25
  %v248 = vunpack.c.l.b16 %v26
  %v249 = vunpack.c.l.b16 %v27
  %v250 = vpack.c.b16 %v235, %v234
  %v251 = vpack.c.b16 %v237, %v236
  %v252 = vpack.c.b16 %v239, %v238
  %v253 = vpack.c.b16 %v241, %v240
  %v254 = vpack.c.b16 %v243, %v242
  %v255 = vpack.c.b16 %v245, %v244
  %v256 = vpack.c.b16 %v247, %v246
  %v257 = vpack.c.b16 %v249, %v248
  %266 = vmatprep.subr.bf16.mxu0 0
  %267 = vmatpush1.bf16.msra.mxu0 %v257
  %268 = vmatprep.subr.bf16.mxu0 0
  %269 = vmatpush1.bf16.msra.mxu0 %v256
  %270 = vmatprep.subr.bf16.mxu0 0
  %271 = vmatpush1.bf16.msra.mxu0 %v255
  %272 = vmatprep.subr.bf16.mxu0 0
  %273 = vmatpush1.bf16.msra.mxu0 %v254
  %274 = vmatprep.subr.bf16.mxu0 0
  %275 = vmatpush1.bf16.msra.mxu0 %v253
  %276 = vmatprep.subr.bf16.mxu0 0
  %277 = vmatpush1.bf16.msra.mxu0 %v252
  %278 = vmatprep.subr.bf16.mxu0 0
  %279 = vmatpush1.bf16.msra.mxu0 %v251
  %280 = vmatprep.subr.bf16.mxu0 0
  %281 = vmatpush1.bf16.msra.mxu0 %v250
  %282 = vmatprep.subr.bf16.mxu0 0
  %283 = vmatpush2.bf16.msra.mxu0 0
  %284 = vmatprep.subr.bf16.mxu0 0
  %285 = vmatpush2.bf16.msra.mxu0 0
  %286 = vmatprep.subr.bf16.mxu0 0
  %287 = vmatpush2.bf16.msra.mxu0 0
  %288 = vmatprep.subr.bf16.mxu0 0
  %289 = vmatpush2.bf16.msra.mxu0 0
  %290 = vmatprep.subr.bf16.mxu0 0
  %291 = vmatpush2.bf16.msra.mxu0 0
  %292 = vmatprep.subr.bf16.mxu0 0
  %293 = vmatpush2.bf16.msra.mxu0 0
  %294 = vmatprep.subr.bf16.mxu0 0
  %295 = vmatpush2.bf16.msra.mxu0 0
  %296 = vmatprep.subr.bf16.mxu0 0
  %297 = vmatpush2.bf16.msra.mxu0 0
  %298 = vmatprep.mubr.bf16.mxu0 0
  %299 = vmatmul.mubr.bf16.gmra.mxu0 %v180
  %v300 = vpop.f32.mrf.mxu0
  %v301 = vadd.f32 %v103, %v300
  %v302 = vpop.f32.mrf.mxu0
  %v303 = vpop.f32.mrf.mxu0
  %v304 = vadd.f32 %v103, %v303
  %v305 = vpop.f32.mrf.mxu0
  %306 = vmatprep.mubr.bf16.mxu0 0
  %307 = vmatmul.mubr.bf16.gmra.mxu0 %v181
  %v308 = vpop.f32.mrf.mxu0
  %v309 = vadd.f32 %v103, %v308
  %v310 = vpop.f32.mrf.mxu0
  %v311 = vpop.f32.mrf.mxu0
  %v312 = vadd.f32 %v103, %v311
  %v313 = vpop.f32.mrf.mxu0
  %314 = vmatprep.mubr.bf16.mxu0 0
  %315 = vmatmul.mubr.bf16.gmra.mxu0 %v182
  %v316 = vpop.f32.mrf.mxu0
  %v317 = vadd.f32 %v103, %v316
  %v318 = vpop.f32.mrf.mxu0
  %v319 = vpop.f32.mrf.mxu0
  %v320 = vadd.f32 %v103, %v319
  %v321 = vpop.f32.mrf.mxu0
  %322 = vmatprep.mubr.bf16.mxu0 0
  %323 = vmatmul.mubr.bf16.gmra.mxu0 %v183
  %v324 = vpop.f32.mrf.mxu0
  %v325 = vadd.f32 %v103, %v324
  %v326 = vpop.f32.mrf.mxu0
  %v327 = vpop.f32.mrf.mxu0
  %v328 = vadd.f32 %v103, %v327
  %v329 = vpop.f32.mrf.mxu0
  %330 = vmatprep.mubr.bf16.mxu0 0
  %331 = vmatmul.mubr.bf16.gmra.mxu0 %v184
  %v332 = vpop.f32.mrf.mxu0
  %v333 = vadd.f32 %v103, %v332
  %v334 = vpop.f32.mrf.mxu0
  %v335 = vpop.f32.mrf.mxu0
  %v336 = vadd.f32 %v103, %v335
  %v337 = vpop.f32.mrf.mxu0
  %338 = vmatprep.mubr.bf16.mxu0 0
  %339 = vmatmul.mubr.bf16.gmra.mxu0 %v185
  %v340 = vpop.f32.mrf.mxu0
  %v341 = vadd.f32 %v103, %v340
  %v342 = vpop.f32.mrf.mxu0
  %v343 = vpop.f32.mrf.mxu0
  %v344 = vadd.f32 %v103, %v343
  %v345 = vpop.f32.mrf.mxu0
  %346 = vmatprep.mubr.bf16.mxu0 0
  %347 = vmatmul.mubr.bf16.gmra.mxu0 %v186
  %v348 = vpop.f32.mrf.mxu0
  %v349 = vadd.f32 %v103, %v348
  %v350 = vpop.f32.mrf.mxu0
  %v351 = vpop.f32.mrf.mxu0
  %v352 = vadd.f32 %v103, %v351
  %v353 = vpop.f32.mrf.mxu0
  %354 = vmatprep.mubr.bf16.mxu0 0
  %355 = vmatmul.mubr.bf16.gmra.mxu0 %v187
  %v356 = vpop.f32.mrf.mxu0
  %v357 = vadd.f32 %v103, %v356
  %v358 = vpop.f32.mrf.mxu0
  %v359 = vpop.f32.mrf.mxu0
  %v360 = vadd.f32 %v103, %v359
  %v361 = vpop.f32.mrf.mxu0
  %362 = vmatprep.mubr.bf16.mxu0 0
  %363 = vmatmul.mubr.bf16.gmra.mxu0 %v188
  %v364 = vpop.f32.mrf.mxu0
  %v365 = vadd.f32 %v103, %v364
  %v366 = vpop.f32.mrf.mxu0
  %v367 = vpop.f32.mrf.mxu0
  %v368 = vadd.f32 %v103, %v367
  %v369 = vpop.f32.mrf.mxu0
  %370 = vmatprep.mubr.bf16.mxu0 0
  %371 = vmatmul.mubr.bf16.gmra.mxu0 %v189
  %v372 = vpop.f32.mrf.mxu0
  %v373 = vadd.f32 %v103, %v372
  %v374 = vpop.f32.mrf.mxu0
  %v375 = vpop.f32.mrf.mxu0
  %v376 = vadd.f32 %v103, %v375
  %v377 = vpop.f32.mrf.mxu0
  %378 = vmatprep.mubr.bf16.mxu0 0
  %379 = vmatmul.mubr.bf16.gmra.mxu0 %v190
  %v380 = vpop.f32.mrf.mxu0
  %v381 = vadd.f32 %v103, %v380
  %v382 = vpop.f32.mrf.mxu0
  %v383 = vpop.f32.mrf.mxu0
  %v384 = vadd.f32 %v103, %v383
  %v385 = vpop.f32.mrf.mxu0
  %386 = vmatprep.mubr.bf16.mxu0 0
  %387 = vmatmul.mubr.bf16.gmra.mxu0 %v191
  %v388 = vpop.f32.mrf.mxu0
  %v389 = vadd.f32 %v103, %v388
  %v390 = vpop.f32.mrf.mxu0
  %v391 = vpop.f32.mrf.mxu0
  %v392 = vadd.f32 %v103, %v391
  %v393 = vpop.f32.mrf.mxu0
  %394 = vmatprep.mubr.bf16.mxu0 0
  %395 = vmatmul.mubr.bf16.gmra.mxu0 %v192
  %v396 = vpop.f32.mrf.mxu0
  %v397 = vadd.f32 %v103, %v396
  %v398 = vpop.f32.mrf.mxu0
  %v399 = vpop.f32.mrf.mxu0
  %v400 = vadd.f32 %v103, %v399
  %v401 = vpop.f32.mrf.mxu0
  %402 = vmatprep.mubr.bf16.mxu0 0
  %403 = vmatmul.mubr.bf16.gmra.mxu0 %v193
  %v404 = vpop.f32.mrf.mxu0
  %v405 = vadd.f32 %v103, %v404
  %v406 = vpop.f32.mrf.mxu0
  %v407 = vpop.f32.mrf.mxu0
  %v408 = vadd.f32 %v103, %v407
  %v409 = vpop.f32.mrf.mxu0
  %410 = vmatprep.mubr.bf16.mxu0 0
  %411 = vmatmul.mubr.bf16.gmra.mxu0 %v194
  %v412 = vpop.f32.mrf.mxu0
  %v413 = vadd.f32 %v103, %v412
  %v414 = vpop.f32.mrf.mxu0
  %v415 = vpop.f32.mrf.mxu0
  %v416 = vadd.f32 %v103, %v415
  %v417 = vpop.f32.mrf.mxu0
  %418 = vmatprep.mubr.bf16.mxu0 0
  %419 = vmatmul.mubr.bf16.gmra.mxu0 %v195
  %v420 = vpop.f32.mrf.mxu0
  %v421 = vadd.f32 %v103, %v420
  %v422 = vpop.f32.mrf.mxu0
  %v423 = vpop.f32.mrf.mxu0
  %v424 = vadd.f32 %v103, %v423
  %v425 = vpop.f32.mrf.mxu0
  %426 = vmatprep.mubr.bf16.mxu0 0
  %427 = vmatmul.mubr.bf16.gmra.mxu0 %v196
  %v428 = vpop.f32.mrf.mxu0
  %v429 = vadd.f32 %v103, %v428
  %v430 = vpop.f32.mrf.mxu0
  %v431 = vpop.f32.mrf.mxu0
  %v432 = vadd.f32 %v103, %v431
  %v433 = vpop.f32.mrf.mxu0
  %434 = vmatprep.mubr.bf16.mxu0 0
  %435 = vmatmul.mubr.bf16.gmra.mxu0 %v197
  %v436 = vpop.f32.mrf.mxu0
  %v437 = vadd.f32 %v103, %v436
  %v438 = vpop.f32.mrf.mxu0
  %v439 = vpop.f32.mrf.mxu0
  %v440 = vadd.f32 %v103, %v439
  %v441 = vpop.f32.mrf.mxu0
  %442 = vmatprep.mubr.bf16.mxu0 0
  %443 = vmatmul.mubr.bf16.gmra.mxu0 %v198
  %v444 = vpop.f32.mrf.mxu0
  %v445 = vadd.f32 %v103, %v444
  %v446 = vpop.f32.mrf.mxu0
  %v447 = vpop.f32.mrf.mxu0
  %v448 = vadd.f32 %v103, %v447
  %v449 = vpop.f32.mrf.mxu0
  %450 = vdwg.mxu0
  %v451 = vtanh.pop %v301
  %v452 = vtanh.pop %v304
  %v453 = vtanh.pop %v309
  %v454 = vtanh.pop %v312
  %v455 = vtanh.pop %v317
  %v456 = vtanh.pop %v320
  %v457 = vtanh.pop %v325
  %v458 = vtanh.pop %v328
  %v459 = vtanh.pop %v333
  %v460 = vtanh.pop %v336
  %v461 = vtanh.pop %v341
  %v462 = vtanh.pop %v344
  %v463 = vtanh.pop %v349
  %v464 = vtanh.pop %v352
  %v465 = vtanh.pop %v357
  %v466 = vtanh.pop %v360
  %v467 = vtanh.pop %v365
  %v468 = vtanh.pop %v368
  %v469 = vtanh.pop %v373
  %v470 = vtanh.pop %v376
  %v471 = vtanh.pop %v381
  %v472 = vtanh.pop %v384
  %v473 = vtanh.pop %v389
  %v474 = vtanh.pop %v392
  %v475 = vtanh.pop %v397
  %v476 = vtanh.pop %v400
  %v477 = vtanh.pop %v405
  %v478 = vtanh.pop %v408
  %v479 = vtanh.pop %v413
  %v480 = vtanh.pop %v416
  %v481 = vtanh.pop %v421
  %v482 = vtanh.pop %v424
  %v483 = vtanh.pop %v429
  %v484 = vtanh.pop %v432
  %v485 = vtanh.pop %v437
  %v486 = vtanh.pop %v440
  %v487 = vtanh.pop %v445
  %v488 = vtanh.pop %v448
  %v489 = vpack.c.bf16 %v452, %v451
  %v490 = vpack.c.bf16 %v454, %v453
  %v491 = vpack.c.bf16 %v456, %v455
  %v492 = vpack.c.bf16 %v458, %v457
  %v493 = vpack.c.bf16 %v460, %v459
  %v494 = vpack.c.bf16 %v462, %v461
  %v495 = vpack.c.bf16 %v464, %v463
  %v496 = vpack.c.bf16 %v466, %v465
  %v497 = vpack.c.bf16 %v468, %v467
  %v498 = vpack.c.bf16 %v470, %v469
  %v499 = vpack.c.bf16 %v472, %v471
  %v500 = vpack.c.bf16 %v474, %v473
  %v501 = vpack.c.bf16 %v476, %v475
  %v502 = vpack.c.bf16 %v478, %v477
  %v503 = vpack.c.bf16 %v480, %v479
  %v504 = vpack.c.bf16 %v482, %v481
  %v505 = vpack.c.bf16 %v484, %v483
  %v506 = vpack.c.bf16 %v486, %v485
  %v507 = vpack.c.bf16 %v488, %v487
  %v508 = vlaneseq
  %v509 = vshrl.u32 %v508, 7
  %v510 = vsub.s32 1, %v509
  %v511 = vrot.slane %v61, %v510
  %v528 = vunpack.c.l.b16 %v28
  %v529 = vunpack.c.l.b16 %v29
  %v530 = vunpack.c.l.b16 %v30
  %v531 = vunpack.c.l.b16 %v31
  %v532 = vunpack.c.l.b16 %v32
  %v533 = vunpack.c.l.b16 %v33
  %v534 = vunpack.c.l.b16 %v34
  %v535 = vunpack.c.l.b16 %v35
  %v536 = vunpack.c.l.b16 %v36
  %v537 = vunpack.c.l.b16 %v37
  %v538 = vunpack.c.l.b16 %v38
  %v539 = vunpack.c.l.b16 %v39
  %v540 = vunpack.c.l.b16 %v40
  %v541 = vunpack.c.l.b16 %v41
  %v542 = vunpack.c.l.b16 %v42
  %v543 = vunpack.c.l.b16 %v43
  %v544 = vpack.c.b16 %v529, %v528
  %v545 = vpack.c.b16 %v531, %v530
  %v546 = vpack.c.b16 %v533, %v532
  %v547 = vpack.c.b16 %v535, %v534
  %v548 = vpack.c.b16 %v537, %v536
  %v549 = vpack.c.b16 %v539, %v538
  %v550 = vpack.c.b16 %v541, %v540
  %v551 = vpack.c.b16 %v543, %v542
  %560 = vmatprep.subr.bf16.mxu0 0
  %561 = vmatpush1.bf16.msra.mxu0 %v551
  %562 = vmatprep.subr.bf16.mxu0 0
  %563 = vmatpush1.bf16.msra.mxu0 %v550
  %564 = vmatprep.subr.bf16.mxu0 0
  %565 = vmatpush1.bf16.msra.mxu0 %v549
  %566 = vmatprep.subr.bf16.mxu0 0
  %567 = vmatpush1.bf16.msra.mxu0 %v548
  %568 = vmatprep.subr.bf16.mxu0 0
  %569 = vmatpush1.bf16.msra.mxu0 %v547
  %570 = vmatprep.subr.bf16.mxu0 0
  %571 = vmatpush1.bf16.msra.mxu0 %v546
  %572 = vmatprep.subr.bf16.mxu0 0
  %573 = vmatpush1.bf16.msra.mxu0 %v545
  %574 = vmatprep.subr.bf16.mxu0 0
  %575 = vmatpush1.bf16.msra.mxu0 %v544
  %576 = vmatprep.subr.bf16.mxu0 0
  %577 = vmatpush2.bf16.msra.mxu0 0
  %578 = vmatprep.subr.bf16.mxu0 0
  %579 = vmatpush2.bf16.msra.mxu0 0
  %580 = vmatprep.subr.bf16.mxu0 0
  %581 = vmatpush2.bf16.msra.mxu0 0
  %582 = vmatprep.subr.bf16.mxu0 0
  %583 = vmatpush2.bf16.msra.mxu0 0
  %584 = vmatprep.subr.bf16.mxu0 0
  %585 = vmatpush2.bf16.msra.mxu0 0
  %586 = vmatprep.subr.bf16.mxu0 0
  %587 = vmatpush2.bf16.msra.mxu0 0
  %588 = vmatprep.subr.bf16.mxu0 0
  %589 = vmatpush2.bf16.msra.mxu0 0
  %590 = vmatprep.subr.bf16.mxu0 0
  %591 = vmatpush2.bf16.msra.mxu0 0
  %592 = vmatprep.mubr.bf16.mxu0 0
  %593 = vmatmul.mubr.bf16.gmra.mxu0 %v489
  %v594 = vpop.f32.mrf.mxu0
  %v595 = vadd.f32 %v511, %v594
  %v596 = vpop.f32.mrf.mxu0
  %v597 = vpop.f32.mrf.mxu0
  %v598 = vadd.f32 %v511, %v597
  %v599 = vpop.f32.mrf.mxu0
  %600 = vmatprep.mubr.bf16.mxu0 0
  %601 = vmatmul.mubr.bf16.gmra.mxu0 %v490
  %v602 = vpop.f32.mrf.mxu0
  %v603 = vadd.f32 %v511, %v602
  %v604 = vpop.f32.mrf.mxu0
  %v605 = vpop.f32.mrf.mxu0
  %v606 = vadd.f32 %v511, %v605
  %v607 = vpop.f32.mrf.mxu0
  %608 = vmatprep.mubr.bf16.mxu0 0
  %609 = vmatmul.mubr.bf16.gmra.mxu0 %v491
  %v610 = vpop.f32.mrf.mxu0
  %v611 = vadd.f32 %v511, %v610
  %v612 = vpop.f32.mrf.mxu0
  %v613 = vpop.f32.mrf.mxu0
  %v614 = vadd.f32 %v511, %v613
  %v615 = vpop.f32.mrf.mxu0
  %616 = vmatprep.mubr.bf16.mxu0 0
  %617 = vmatmul.mubr.bf16.gmra.mxu0 %v492
  %v618 = vpop.f32.mrf.mxu0
  %v619 = vadd.f32 %v511, %v618
  %v620 = vpop.f32.mrf.mxu0
  %v621 = vpop.f32.mrf.mxu0
  %v622 = vadd.f32 %v511, %v621
  %v623 = vpop.f32.mrf.mxu0
  %624 = vmatprep.mubr.bf16.mxu0 0
  %625 = vmatmul.mubr.bf16.gmra.mxu0 %v493
  %v626 = vpop.f32.mrf.mxu0
  %v627 = vadd.f32 %v511, %v626
  %v628 = vpop.f32.mrf.mxu0
  %v629 = vpop.f32.mrf.mxu0
  %v630 = vadd.f32 %v511, %v629
  %v631 = vpop.f32.mrf.mxu0
  %632 = vmatprep.mubr.bf16.mxu0 0
  %633 = vmatmul.mubr.bf16.gmra.mxu0 %v494
  %v634 = vpop.f32.mrf.mxu0
  %v635 = vadd.f32 %v511, %v634
  %v636 = vpop.f32.mrf.mxu0
  %v637 = vpop.f32.mrf.mxu0
  %v638 = vadd.f32 %v511, %v637
  %v639 = vpop.f32.mrf.mxu0
  %640 = vmatprep.mubr.bf16.mxu0 0
  %641 = vmatmul.mubr.bf16.gmra.mxu0 %v495
  %v642 = vpop.f32.mrf.mxu0
  %v643 = vadd.f32 %v511, %v642
  %v644 = vpop.f32.mrf.mxu0
  %v645 = vpop.f32.mrf.mxu0
  %v646 = vadd.f32 %v511, %v645
  %v647 = vpop.f32.mrf.mxu0
  %648 = vmatprep.mubr.bf16.mxu0 0
  %649 = vmatmul.mubr.bf16.gmra.mxu0 %v496
  %v650 = vpop.f32.mrf.mxu0
  %v651 = vadd.f32 %v511, %v650
  %v652 = vpop.f32.mrf.mxu0
  %v653 = vpop.f32.mrf.mxu0
  %v654 = vadd.f32 %v511, %v653
  %v655 = vpop.f32.mrf.mxu0
  %656 = vmatprep.mubr.bf16.mxu0 0
  %657 = vmatmul.mubr.bf16.gmra.mxu0 %v497
  %v658 = vpop.f32.mrf.mxu0
  %v659 = vadd.f32 %v511, %v658
  %v660 = vpop.f32.mrf.mxu0
  %v661 = vpop.f32.mrf.mxu0
  %v662 = vadd.f32 %v511, %v661
  %v663 = vpop.f32.mrf.mxu0
  %664 = vmatprep.mubr.bf16.mxu0 0
  %665 = vmatmul.mubr.bf16.gmra.mxu0 %v498
  %v666 = vpop.f32.mrf.mxu0
  %v667 = vadd.f32 %v511, %v666
  %v668 = vpop.f32.mrf.mxu0
  %v669 = vpop.f32.mrf.mxu0
  %v670 = vadd.f32 %v511, %v669
  %v671 = vpop.f32.mrf.mxu0
  %672 = vmatprep.mubr.bf16.mxu0 0
  %673 = vmatmul.mubr.bf16.gmra.mxu0 %v499
  %v674 = vpop.f32.mrf.mxu0
  %v675 = vadd.f32 %v511, %v674
  %v676 = vpop.f32.mrf.mxu0
  %v677 = vpop.f32.mrf.mxu0
  %v678 = vadd.f32 %v511, %v677
  %v679 = vpop.f32.mrf.mxu0
  %680 = vmatprep.mubr.bf16.mxu0 0
  %681 = vmatmul.mubr.bf16.gmra.mxu0 %v500
  %v682 = vpop.f32.mrf.mxu0
  %v683 = vadd.f32 %v511, %v682
  %v684 = vpop.f32.mrf.mxu0
  %v685 = vpop.f32.mrf.mxu0
  %v686 = vadd.f32 %v511, %v685
  %v687 = vpop.f32.mrf.mxu0
  %688 = vmatprep.mubr.bf16.mxu0 0
  %689 = vmatmul.mubr.bf16.gmra.mxu0 %v501
  %v690 = vpop.f32.mrf.mxu0
  %v691 = vadd.f32 %v511, %v690
  %v692 = vpop.f32.mrf.mxu0
  %v693 = vpop.f32.mrf.mxu0
  %v694 = vadd.f32 %v511, %v693
  %v695 = vpop.f32.mrf.mxu0
  %696 = vmatprep.mubr.bf16.mxu0 0
  %697 = vmatmul.mubr.bf16.gmra.mxu0 %v502
  %v698 = vpop.f32.mrf.mxu0
  %v699 = vadd.f32 %v511, %v698
  %v700 = vpop.f32.mrf.mxu0
  %v701 = vpop.f32.mrf.mxu0
  %v702 = vadd.f32 %v511, %v701
  %v703 = vpop.f32.mrf.mxu0
  %704 = vmatprep.mubr.bf16.mxu0 0
  %705 = vmatmul.mubr.bf16.gmra.mxu0 %v503
  %v706 = vpop.f32.mrf.mxu0
  %v707 = vadd.f32 %v511, %v706
  %v708 = vpop.f32.mrf.mxu0
  %v709 = vpop.f32.mrf.mxu0
  %v710 = vadd.f32 %v511, %v709
  %v711 = vpop.f32.mrf.mxu0
  %712 = vmatprep.mubr.bf16.mxu0 0
  %713 = vmatmul.mubr.bf16.gmra.mxu0 %v504
  %v714 = vpop.f32.mrf.mxu0
  %v715 = vadd.f32 %v511, %v714
  %v716 = vpop.f32.mrf.mxu0
  %v717 = vpop.f32.mrf.mxu0
  %v718 = vadd.f32 %v511, %v717
  %v719 = vpop.f32.mrf.mxu0
  %720 = vmatprep.mubr.bf16.mxu0 0
  %721 = vmatmul.mubr.bf16.gmra.mxu0 %v505
  %v722 = vpop.f32.mrf.mxu0
  %v723 = vadd.f32 %v511, %v722
  %v724 = vpop.f32.mrf.mxu0
  %v725 = vpop.f32.mrf.mxu0
  %v726 = vadd.f32 %v511, %v725
  %v727 = vpop.f32.mrf.mxu0
  %728 = vmatprep.mubr.bf16.mxu0 0
  %729 = vmatmul.mubr.bf16.gmra.mxu0 %v506
  %v730 = vpop.f32.mrf.mxu0
  %v731 = vadd.f32 %v511, %v730
  %v732 = vpop.f32.mrf.mxu0
  %v733 = vpop.f32.mrf.mxu0
  %v734 = vadd.f32 %v511, %v733
  %v735 = vpop.f32.mrf.mxu0
  %736 = vmatprep.mubr.bf16.mxu0 0
  %737 = vmatmul.mubr.bf16.gmra.mxu0 %v507
  %v738 = vpop.f32.mrf.mxu0
  %v739 = vadd.f32 %v511, %v738
  %v740 = vpop.f32.mrf.mxu0
  %v741 = vpop.f32.mrf.mxu0
  %v742 = vadd.f32 %v511, %v741
  %v743 = vpop.f32.mrf.mxu0
  %744 = vdwg.mxu0
  %v745 = vtanh.pop %v595
  %v746 = vtanh.pop %v598
  %v747 = vtanh.pop %v603
  %v748 = vtanh.pop %v606
  %v749 = vtanh.pop %v611
  %v750 = vtanh.pop %v614
  %v751 = vtanh.pop %v619
  %v752 = vtanh.pop %v622
  %v753 = vtanh.pop %v627
  %v754 = vtanh.pop %v630
  %v755 = vtanh.pop %v635
  %v756 = vtanh.pop %v638
  %v757 = vtanh.pop %v643
  %v758 = vtanh.pop %v646
  %v759 = vtanh.pop %v651
  %v760 = vtanh.pop %v654
  %v761 = vtanh.pop %v659
  %v762 = vtanh.pop %v662
  %v763 = vtanh.pop %v667
  %v764 = vtanh.pop %v670
  %v765 = vtanh.pop %v675
  %v766 = vtanh.pop %v678
  %v767 = vtanh.pop %v683
  %v768 = vtanh.pop %v686
  %v769 = vtanh.pop %v691
  %v770 = vtanh.pop %v694
  %v771 = vtanh.pop %v699
  %v772 = vtanh.pop %v702
  %v773 = vtanh.pop %v707
  %v774 = vtanh.pop %v710
  %v775 = vtanh.pop %v715
  %v776 = vtanh.pop %v718
  %v777 = vtanh.pop %v723
  %v778 = vtanh.pop %v726
  %v779 = vtanh.pop %v731
  %v780 = vtanh.pop %v734
  %v781 = vtanh.pop %v739
  %v782 = vtanh.pop %v742
  %v783 = vpack.c.bf16 %v746, %v745
  %v784 = vpack.c.bf16 %v748, %v747
  %v785 = vpack.c.bf16 %v750, %v749
  %v786 = vpack.c.bf16 %v752, %v751
  %v787 = vpack.c.bf16 %v754, %v753
  %v788 = vpack.c.bf16 %v756, %v755
  %v789 = vpack.c.bf16 %v758, %v757
  %v790 = vpack.c.bf16 %v760, %v759
  %v791 = vpack.c.bf16 %v762, %v761
  %v792 = vpack.c.bf16 %v764, %v763
  %v793 = vpack.c.bf16 %v766, %v765
  %v794 = vpack.c.bf16 %v768, %v767
  %v795 = vpack.c.bf16 %v770, %v769
  %v796 = vpack.c.bf16 %v772, %v771
  %v797 = vpack.c.bf16 %v774, %v773
  %v798 = vpack.c.bf16 %v776, %v775
  %v799 = vpack.c.bf16 %v778, %v777
  %v800 = vpack.c.bf16 %v780, %v779
  %v801 = vpack.c.bf16 %v782, %v781
  %v802 = vlaneseq
  %v803 = vshrl.u32 %v802, 7
  %v804 = vsub.s32 2, %v803
  %v805 = vrot.slane %v61, %v804
  %v822 = vunpack.c.l.b16 %v44
  %v823 = vunpack.c.l.b16 %v45
  %v824 = vunpack.c.l.b16 %v46
  %v825 = vunpack.c.l.b16 %v47
  %v826 = vunpack.c.l.b16 %v48
  %v827 = vunpack.c.l.b16 %v49
  %v828 = vunpack.c.l.b16 %v50
  %v829 = vunpack.c.l.b16 %v51
  %v830 = vunpack.c.l.b16 %v52
  %v831 = vunpack.c.l.b16 %v53
  %v832 = vunpack.c.l.b16 %v54
  %v833 = vunpack.c.l.b16 %v55
  %v834 = vunpack.c.l.b16 %v56
  %v835 = vunpack.c.l.b16 %v57
  %v836 = vunpack.c.l.b16 %v58
  %v837 = vunpack.c.l.b16 %v59
  %v838 = vpack.c.b16 %v823, %v822
  %v839 = vpack.c.b16 %v825, %v824
  %v840 = vpack.c.b16 %v827, %v826
  %v841 = vpack.c.b16 %v829, %v828
  %v842 = vpack.c.b16 %v831, %v830
  %v843 = vpack.c.b16 %v833, %v832
  %v844 = vpack.c.b16 %v835, %v834
  %v845 = vpack.c.b16 %v837, %v836
  %854 = vmatprep.subr.bf16.mxu0 0
  %855 = vmatpush1.bf16.msra.mxu0 %v845
  %856 = vmatprep.subr.bf16.mxu0 0
  %857 = vmatpush1.bf16.msra.mxu0 %v844
  %858 = vmatprep.subr.bf16.mxu0 0
  %859 = vmatpush1.bf16.msra.mxu0 %v843
  %860 = vmatprep.subr.bf16.mxu0 0
  %861 = vmatpush1.bf16.msra.mxu0 %v842
  %862 = vmatprep.subr.bf16.mxu0 0
  %863 = vmatpush1.bf16.msra.mxu0 %v841
  %864 = vmatprep.subr.bf16.mxu0 0
  %865 = vmatpush1.bf16.msra.mxu0 %v840
  %866 = vmatprep.subr.bf16.mxu0 0
  %867 = vmatpush1.bf16.msra.mxu0 %v839
  %868 = vmatprep.subr.bf16.mxu0 0
  %869 = vmatpush1.bf16.msra.mxu0 %v838
  %870 = vmatprep.subr.bf16.mxu0 0
  %871 = vmatpush2.bf16.msra.mxu0 0
  %872 = vmatprep.subr.bf16.mxu0 0
  %873 = vmatpush2.bf16.msra.mxu0 0
  %874 = vmatprep.subr.bf16.mxu0 0
  %875 = vmatpush2.bf16.msra.mxu0 0
  %876 = vmatprep.subr.bf16.mxu0 0
  %877 = vmatpush2.bf16.msra.mxu0 0
  %878 = vmatprep.subr.bf16.mxu0 0
  %879 = vmatpush2.bf16.msra.mxu0 0
  %880 = vmatprep.subr.bf16.mxu0 0
  %881 = vmatpush2.bf16.msra.mxu0 0
  %882 = vmatprep.subr.bf16.mxu0 0
  %883 = vmatpush2.bf16.msra.mxu0 0
  %884 = vmatprep.subr.bf16.mxu0 0
  %885 = vmatpush2.bf16.msra.mxu0 0
  %886 = vmatprep.mubr.bf16.mxu0 0
  %887 = vmatmul.mubr.bf16.gmra.mxu0 %v783
  %v888 = vpop.f32.mrf.mxu0
  %v889 = vadd.f32 %v805, %v888
  %v890 = vpop.f32.mrf.mxu0
  %v891 = vpop.f32.mrf.mxu0
  %v892 = vadd.f32 %v805, %v891
  %v893 = vpop.f32.mrf.mxu0
  %894 = vmatprep.mubr.bf16.mxu0 0
  %895 = vmatmul.mubr.bf16.gmra.mxu0 %v784
  %v896 = vpop.f32.mrf.mxu0
  %v897 = vadd.f32 %v805, %v896
  %v898 = vpop.f32.mrf.mxu0
  %v899 = vpop.f32.mrf.mxu0
  %v900 = vadd.f32 %v805, %v899
  %v901 = vpop.f32.mrf.mxu0
  %902 = vmatprep.mubr.bf16.mxu0 0
  %903 = vmatmul.mubr.bf16.gmra.mxu0 %v785
  %v904 = vpop.f32.mrf.mxu0
  %v905 = vadd.f32 %v805, %v904
  %v906 = vpop.f32.mrf.mxu0
  %v907 = vpop.f32.mrf.mxu0
  %v908 = vadd.f32 %v805, %v907
  %v909 = vpop.f32.mrf.mxu0
  %910 = vmatprep.mubr.bf16.mxu0 0
  %911 = vmatmul.mubr.bf16.gmra.mxu0 %v786
  %v912 = vpop.f32.mrf.mxu0
  %v913 = vadd.f32 %v805, %v912
  %v914 = vpop.f32.mrf.mxu0
  %v915 = vpop.f32.mrf.mxu0
  %v916 = vadd.f32 %v805, %v915
  %v917 = vpop.f32.mrf.mxu0
  %918 = vmatprep.mubr.bf16.mxu0 0
  %919 = vmatmul.mubr.bf16.gmra.mxu0 %v787
  %v920 = vpop.f32.mrf.mxu0
  %v921 = vadd.f32 %v805, %v920
  %v922 = vpop.f32.mrf.mxu0
  %v923 = vpop.f32.mrf.mxu0
  %v924 = vadd.f32 %v805, %v923
  %v925 = vpop.f32.mrf.mxu0
  %926 = vmatprep.mubr.bf16.mxu0 0
  %927 = vmatmul.mubr.bf16.gmra.mxu0 %v788
  %v928 = vpop.f32.mrf.mxu0
  %v929 = vadd.f32 %v805, %v928
  %v930 = vpop.f32.mrf.mxu0
  %v931 = vpop.f32.mrf.mxu0
  %v932 = vadd.f32 %v805, %v931
  %v933 = vpop.f32.mrf.mxu0
  %934 = vmatprep.mubr.bf16.mxu0 0
  %935 = vmatmul.mubr.bf16.gmra.mxu0 %v789
  %v936 = vpop.f32.mrf.mxu0
  %v937 = vadd.f32 %v805, %v936
  %v938 = vpop.f32.mrf.mxu0
  %v939 = vpop.f32.mrf.mxu0
  %v940 = vadd.f32 %v805, %v939
  %v941 = vpop.f32.mrf.mxu0
  %942 = vmatprep.mubr.bf16.mxu0 0
  %943 = vmatmul.mubr.bf16.gmra.mxu0 %v790
  %v944 = vpop.f32.mrf.mxu0
  %v945 = vadd.f32 %v805, %v944
  %v946 = vpop.f32.mrf.mxu0
  %v947 = vpop.f32.mrf.mxu0
  %v948 = vadd.f32 %v805, %v947
  %v949 = vpop.f32.mrf.mxu0
  %950 = vmatprep.mubr.bf16.mxu0 0
  %951 = vmatmul.mubr.bf16.gmra.mxu0 %v791
  %v952 = vpop.f32.mrf.mxu0
  %v953 = vadd.f32 %v805, %v952
  %v954 = vpop.f32.mrf.mxu0
  %v955 = vpop.f32.mrf.mxu0
  %v956 = vadd.f32 %v805, %v955
  %v957 = vpop.f32.mrf.mxu0
  %958 = vmatprep.mubr.bf16.mxu0 0
  %959 = vmatmul.mubr.bf16.gmra.mxu0 %v792
  %v960 = vpop.f32.mrf.mxu0
  %v961 = vadd.f32 %v805, %v960
  %v962 = vpop.f32.mrf.mxu0
  %v963 = vpop.f32.mrf.mxu0
  %v964 = vadd.f32 %v805, %v963
  %v965 = vpop.f32.mrf.mxu0
  %966 = vmatprep.mubr.bf16.mxu0 0
  %967 = vmatmul.mubr.bf16.gmra.mxu0 %v793
  %v968 = vpop.f32.mrf.mxu0
  %v969 = vadd.f32 %v805, %v968
  %v970 = vpop.f32.mrf.mxu0
  %v971 = vpop.f32.mrf.mxu0
  %v972 = vadd.f32 %v805, %v971
  %v973 = vpop.f32.mrf.mxu0
  %974 = vmatprep.mubr.bf16.mxu0 0
  %975 = vmatmul.mubr.bf16.gmra.mxu0 %v794
  %v976 = vpop.f32.mrf.mxu0
  %v977 = vadd.f32 %v805, %v976
  %v978 = vpop.f32.mrf.mxu0
  %v979 = vpop.f32.mrf.mxu0
  %v980 = vadd.f32 %v805, %v979
  %v981 = vpop.f32.mrf.mxu0
  %982 = vmatprep.mubr.bf16.mxu0 0
  %983 = vmatmul.mubr.bf16.gmra.mxu0 %v795
  %v984 = vpop.f32.mrf.mxu0
  %v985 = vadd.f32 %v805, %v984
  %v986 = vpop.f32.mrf.mxu0
  %v987 = vpop.f32.mrf.mxu0
  %v988 = vadd.f32 %v805, %v987
  %v989 = vpop.f32.mrf.mxu0
  %990 = vmatprep.mubr.bf16.mxu0 0
  %991 = vmatmul.mubr.bf16.gmra.mxu0 %v796
  %v992 = vpop.f32.mrf.mxu0
  %v993 = vadd.f32 %v805, %v992
  %v994 = vpop.f32.mrf.mxu0
  %v995 = vpop.f32.mrf.mxu0
  %v996 = vadd.f32 %v805, %v995
  %v997 = vpop.f32.mrf.mxu0
  %998 = vmatprep.mubr.bf16.mxu0 0
  %999 = vmatmul.mubr.bf16.gmra.mxu0 %v797
  %v1000 = vpop.f32.mrf.mxu0
  %v1001 = vadd.f32 %v805, %v1000
  %v1002 = vpop.f32.mrf.mxu0
  %v1003 = vpop.f32.mrf.mxu0
  %v1004 = vadd.f32 %v805, %v1003
  %v1005 = vpop.f32.mrf.mxu0
  %1006 = vmatprep.mubr.bf16.mxu0 0
  %1007 = vmatmul.mubr.bf16.gmra.mxu0 %v798
  %v1008 = vpop.f32.mrf.mxu0
  %v1009 = vadd.f32 %v805, %v1008
  %v1010 = vpop.f32.mrf.mxu0
  %v1011 = vpop.f32.mrf.mxu0
  %v1012 = vadd.f32 %v805, %v1011
  %v1013 = vpop.f32.mrf.mxu0
  %1014 = vmatprep.mubr.bf16.mxu0 0
  %1015 = vmatmul.mubr.bf16.gmra.mxu0 %v799
  %v1016 = vpop.f32.mrf.mxu0
  %v1017 = vadd.f32 %v805, %v1016
  %v1018 = vpop.f32.mrf.mxu0
  %v1019 = vpop.f32.mrf.mxu0
  %v1020 = vadd.f32 %v805, %v1019
  %v1021 = vpop.f32.mrf.mxu0
  %1022 = vmatprep.mubr.bf16.mxu0 0
  %1023 = vmatmul.mubr.bf16.gmra.mxu0 %v800
  %v1024 = vpop.f32.mrf.mxu0
  %v1025 = vadd.f32 %v805, %v1024
  %v1026 = vpop.f32.mrf.mxu0
  %v1027 = vpop.f32.mrf.mxu0
  %v1028 = vadd.f32 %v805, %v1027
  %v1029 = vpop.f32.mrf.mxu0
  %1030 = vmatprep.mubr.bf16.mxu0 0
  %1031 = vmatmul.mubr.bf16.gmra.mxu0 %v801
  %v1032 = vpop.f32.mrf.mxu0
  %v1033 = vadd.f32 %v805, %v1032
  %v1034 = vpop.f32.mrf.mxu0
  %v1035 = vpop.f32.mrf.mxu0
  %v1036 = vadd.f32 %v805, %v1035
  %v1037 = vpop.f32.mrf.mxu0
  %1038 = vdwg.mxu0
  %1039 = vst [vmem:[%s2] sm:$0xff] %v889
  %1040 = vst [vmem:[%s2 + $0x8] sm:$0xff] %v892
  %1041 = vst [vmem:[%s2 + $0x10] sm:$0xff] %v897
  %1042 = vst [vmem:[%s2 + $0x18] sm:$0xff] %v900
  %1043 = vst [vmem:[%s2 + $0x20] sm:$0xff] %v905
  %1044 = vst [vmem:[%s2 + $0x28] sm:$0xff] %v908
  %1045 = vst [vmem:[%s2 + $0x30] sm:$0xff] %v913
  %1046 = vst [vmem:[%s2 + $0x38] sm:$0xff] %v916
  %1047 = vst [vmem:[%s2 + $0x40] sm:$0xff] %v921
  %1048 = vst [vmem:[%s2 + $0x48] sm:$0xff] %v924
  %1049 = vst [vmem:[%s2 + $0x50] sm:$0xff] %v929
  %1050 = vst [vmem:[%s2 + $0x58] sm:$0xff] %v932
  %1051 = vst [vmem:[%s2 + $0x60] sm:$0xff] %v937
  %1052 = vst [vmem:[%s2 + $0x68] sm:$0xff] %v940
  %1053 = vst [vmem:[%s2 + $0x70] sm:$0xff] %v945
  %1054 = vst [vmem:[%s2 + $0x78] sm:$0xff] %v948
  %1055 = vst [vmem:[%s2 + $0x80] sm:$0xff] %v953
  %1056 = vst [vmem:[%s2 + $0x88] sm:$0xff] %v956
  %1057 = vst [vmem:[%s2 + $0x90] sm:$0xff] %v961
  %1058 = vst [vmem:[%s2 + $0x98] sm:$0xff] %v964
  %1059 = vst [vmem:[%s2 + $0xa0] sm:$0xff] %v969
  %1060 = vst [vmem:[%s2 + $0xa8] sm:$0xff] %v972
  %1061 = vst [vmem:[%s2 + $0xb0] sm:$0xff] %v977
  %1062 = vst [vmem:[%s2 + $0xb8] sm:$0xff] %v980
  %1063 = vst [vmem:[%s2 + $0xc0] sm:$0xff] %v985
  %1064 = vst [vmem:[%s2 + $0xc8] sm:$0xff] %v988
  %1065 = vst [vmem:[%s2 + $0xd0] sm:$0xff] %v993
  %1066 = vst [vmem:[%s2 + $0xd8] sm:$0xff] %v996
  %1067 = vst [vmem:[%s2 + $0xe0] sm:$0xff] %v1001
  %1068 = vst [vmem:[%s2 + $0xe8] sm:$0xff] %v1004
  %1069 = vst [vmem:[%s2 + $0xf0] sm:$0xff] %v1009
  %1070 = vst [vmem:[%s2 + $0xf8] sm:$0xff] %v1012
  %1071 = vst [vmem:[%s2 + $0x100] sm:$0xff] %v1017
  %1072 = vst [vmem:[%s2 + $0x108] sm:$0xff] %v1020
  %1073 = vst [vmem:[%s2 + $0x110] sm:$0xff] %v1025
  %1074 = vst [vmem:[%s2 + $0x118] sm:$0xff] %v1028
  %1075 = vst [vmem:[%s2 + $0x120] sm:$0xff] %v1033
  %1076 = vst [vmem:[%s2 + $0x128] sm:$0xff] %v1036
  // Predicated region
  $region10: #{latent_ode_func.1} parent=0 // pred_check
    _
  $region11: #{latent_ode_func.1} parent=0 // pred_check_branch
    %1078 = sbr.rel (0) target = $region13
  $region12: #{latent_ode_func.1} parent=0 // pred_region
    _
  $region13: #{latent_ode_func.1} parent=0 // pred_fallthru
    _
  // Predicated region
  $region14: #{latent_ode_func.1} parent=0 // pred_check
    _
  $region15: #{latent_ode_func.1} parent=0 // pred_check_branch
    %1080 = sbr.rel (0) target = $region17
  $region16: #{latent_ode_func.1} parent=0 // pred_region
    _
  $region17: #{latent_ode_func.1} parent=0 // pred_fallthru
    _

</llo_original>
